<compile_context>
chip_gen: v7x
topology: tpu7x:2x2x1
jax: 0.10.0
libtpu: 0.0.40
codegen_flags: <defaults>
</compile_context>

<pallas_src>
import functools

import jax
import jax.numpy as jnp
from jax import lax
from jax.experimental import pallas as pl
from jax.experimental.pallas import tpu as pltpu


def _round_up(n: int, m: int) -> int:
    return ((n + m - 1) // m) * m


_NEG_BIG = -1e30          # bias for padded output lanes -> softmax weight 0
_W_SLAB_BYTES = 4 << 20   # per-buffer cap for a (TK, Dout_p) weight slab
_VMEM_BUDGET = 12 << 20   # conservative: under v5e's 16 MiB default scoped VMEM
_TM_CAP = 512             # ~85% of HBM roofline at 512-row tiles (measured)


# ------------------------------- kernels -----------------------------------

def _softmax_gelu_store(h, b, o_ref, gelu_approx):
    """h: (TM, Dout_p) f32 matmul result.  Writes gelu(softmax(h + b))."""
    h = h + b                                      # bias (already holds the +1.0)
    h = h - jnp.max(h, axis=-1, keepdims=True)     # reuse h -> fewer live f32 tiles
    e = jnp.exp(h)
    p = e * pl.reciprocal(jnp.sum(e, axis=-1, keepdims=True), approx=True)
    if gelu_approx:
        o = jax.nn.gelu(p, approximate=True)       # tanh -> EUP slot (optional path)
    else:
        # Exact erf GELU -- matches torch.nn.functional.gelu default.
        o = 0.5 * p * (1.0 + lax.erf(p * 0.7071067811865476))
    o_ref[...] = o.astype(o_ref.dtype)


def _kernel_single_k(x_ref, w_ref, b_ref, o_ref, *, gelu_approx):
    # W held whole (single-buffered resident block).
    h = jnp.dot(x_ref[...], w_ref[...], preferred_element_type=jnp.float32)
    _softmax_gelu_store(h, b_ref[...], o_ref, gelu_approx)


def _kernel_multi_k(x_ref, w_ref, b_ref, o_ref, acc_ref, *, gelu_approx):
    # W streamed in (TK, Dout_p) slabs; f32 VMEM accumulator across the K axis.
    k = pl.program_id(1)

    @pl.when(k == 0)
    def _():
        acc_ref[...] = jnp.zeros_like(acc_ref)

    acc_ref[...] += jnp.dot(x_ref[...], w_ref[...],
                            preferred_element_type=jnp.float32)

    @pl.when(k == pl.num_programs(1) - 1)
    def _():
        _softmax_gelu_store(acc_ref[...], b_ref[...], o_ref, gelu_approx)


# ---------------------------- host-side setup -------------------------------

def prepare_params(w, b, *, matmul_dtype=None):
    """Pad / cast the (static) weights ONCE.

    w: (Din, Dout) [in, out] layout;  b: (Dout,).
    Returns a dict consumed by `my_module_forward`.
    """
    Din, Dout = w.shape
    if matmul_dtype is None:
        # bf16-native MXU on v6e/v7x for non-trivial layers; f32 for tiny layers
        # (and whenever exact PyTorch parity is required).
        matmul_dtype = jnp.bfloat16 if (Din >= 128 and Dout >= 128) else jnp.float32
    wb = jnp.dtype(matmul_dtype).itemsize

    Dout_p = _round_up(Dout, 128)                  # lane-dense output axis
    Din_p = _round_up(Din, 128)

    # K tiling: hold W whole when the slab is modest, otherwise stream slabs
    # (keeps the kernel shape-robust on v7x's 64 MiB VMEM).
    if Din_p * Dout_p * wb <= _W_SLAB_BYTES:
        tk = Din_p
    else:
        tk = max(128, (_W_SLAB_BYTES // (Dout_p * wb)) // 128 * 128)
        Din_p = _round_up(Din_p, tk)
    nk = Din_p // tk

    w_p = (jnp.zeros((Din_p, Dout_p), matmul_dtype)
           .at[:Din, :Dout].set(w.astype(matmul_dtype)))
    # "+1.0" folded into the bias; padded lanes -> -1e30 (softmax prob 0). f32.
    b_p = (jnp.full((1, Dout_p), _NEG_BIG, jnp.float32)
           .at[0, :Dout].set(b.astype(jnp.float32) + 1.0))

    return dict(w_p=w_p, b_p=b_p, Din=Din, Dout=Dout, Din_p=Din_p,
                Dout_p=Dout_p, tk=tk, nk=nk, matmul_dtype=matmul_dtype)


def _choose_tm(B, tk, Dout_p, nk, act_bytes):
    """Batch tile from a per-step VMEM budget; >=2 grid steps when possible."""
    w_bufs = 1 if nk == 1 else 2
    fixed = tk * Dout_p * act_bytes * w_bufs + 8 * Dout_p * 4      # W slab + bias
    per_row = (tk * act_bytes * 2                                   # x (2 bufs)
               + Dout_p * 4 * 2                                     # out (2 bufs)
               + (Dout_p * 4 if nk > 1 else 0))                     # f32 acc
    tm = max(8, (_VMEM_BUDGET - fixed) // per_row)
    tm = min(tm, _TM_CAP)
    base = _round_up(B, 8)
    tm = min(tm, base)
    if base >= 16:  # ensure >=2 batch tiles -> both v7x TensorCores get work
        tm = min(tm, max(8, (base // 2) // 8 * 8))
    return max(8, (tm // 8) * 8)


def _vmem_estimate(tm, tk, Dout_p, nk, act_bytes):
    w_bufs = 1 if nk == 1 else 2
    return (tm * tk * act_bytes * 2
            + tk * Dout_p * act_bytes * w_bufs
            + 8 * Dout_p * 4
            + tm * Dout_p * 4 * 2
            + (tm * Dout_p * 4 if nk > 1 else 0))


# ------------------------------- forward ------------------------------------

def my_module_forward(x, params, *, gelu_approx=False, out_dtype=jnp.float32):
    """Fused linear(+1) -> softmax(-1) -> gelu.  x: (B, Din)."""
    B, Din = x.shape
    assert Din == params["Din"], "feature-dim mismatch vs prepared weights"
    Din_p, Dout_p = params["Din_p"], params["Dout_p"]
    tk, nk = params["tk"], params["nk"]
    mdt = params["matmul_dtype"]
    act_bytes = jnp.dtype(mdt).itemsize

    tm = _choose_tm(B, tk, Dout_p, nk, act_bytes)
    B_p = _round_up(B, tm)

    # Activations padded/cast on the host in the matmul dtype (bf16 path halves
    # the streamed x bytes; no in-kernel cast). Padded rows are sliced off below.
    x_p = jnp.zeros((B_p, Din_p), mdt).at[:B, :Din].set(x.astype(mdt))

    est = _vmem_estimate(tm, tk, Dout_p, nk, act_bytes)
    # Only raise the scoped-VMEM limit when the default might be too small.
    vmem_limit = int(min(est * 2.5 + (2 << 20), 40 << 20)) if est > (12 << 20) else None

    def build(single_buffer_resident):
        def resident(shape, index_map):
            if single_buffer_resident:
                return pl.BlockSpec(shape, index_map, pipeline_mode=pl.Buffered(1))
            return pl.BlockSpec(shape, index_map)

        if nk == 1:
            kernel = functools.partial(_kernel_single_k, gelu_approx=gelu_approx)
            grid = (B_p // tm,)
            in_specs = [
                pl.BlockSpec((tm, Din_p), lambda i: (i, 0)),        # x (pipelined)
                resident((Din_p, Dout_p), lambda i: (0, 0)),        # W resident, 1 buf
                resident((1, Dout_p), lambda i: (0, 0)),            # b resident, 1 buf
            ]
            out_specs = pl.BlockSpec((tm, Dout_p), lambda i: (i, 0))
            scratch = []
            sem = ("parallel",)
        else:
            kernel = functools.partial(_kernel_multi_k, gelu_approx=gelu_approx)
            grid = (B_p // tm, nk)                                  # reduction last
            in_specs = [
                pl.BlockSpec((tm, tk), lambda i, k: (i, k)),        # x tile
                pl.BlockSpec((tk, Dout_p), lambda i, k: (k, 0)),    # W slab (streamed)
                resident((1, Dout_p), lambda i, k: (0, 0)),         # b resident, 1 buf
            ]
            out_specs = pl.BlockSpec((tm, Dout_p), lambda i, k: (i, 0))
            scratch = [pltpu.VMEM((tm, Dout_p), jnp.float32)]       # f32 accumulator
            sem = ("parallel", "arbitrary")

        return pl.pallas_call(
            kernel,
            out_shape=jax.ShapeDtypeStruct((B_p, Dout_p), out_dtype),
            grid_spec=pltpu.PrefetchScalarGridSpec(
                num_scalar_prefetch=0,
                grid=grid,
                in_specs=in_specs,
                out_specs=out_specs,
                scratch_shapes=scratch,
            ),
            compiler_params=pltpu.CompilerParams(
                dimension_semantics=sem,
                vmem_limit_bytes=vmem_limit,
            ),
        )

    args = (x_p, params["w_p"], params["b_p"])
    try:
        out_p = build(True)(*args)
    except Exception:
        # Fallback if single-buffering via pipeline_mode is unavailable in this
        # jax version; only costs one extra resident-W buffer of VMEM.
        out_p = build(False)(*args)

    return out_p[:B, :params["Dout"]]


# --------------------------------- demo -------------------------------------

if __name__ == "__main__":
    key = jax.random.PRNGKey(0)
    kx, kw, kb = jax.random.split(key, 3)

    # Shapes implied by the PyTorch module: x = torch.randn(2, 4), Linear(4, 4).
    B, Din, Dout = 2, 4, 4

    x = jax.random.normal(kx, (B, Din), dtype=jnp.float32)

    # PyTorch-style Linear init: uniform(-1/sqrt(in), +1/sqrt(in)).
    bound = 1.0 / (Din ** 0.5)
    w_torch_layout = jax.random.uniform(kw, (Dout, Din), dtype=jnp.float32,
                                        minval=-bound, maxval=bound)
    b = jax.random.uniform(kb, (Dout,), dtype=jnp.float32,
                           minval=-bound, maxval=bound)
    w = w_torch_layout.T  # kernel expects [in, out]

    params = prepare_params(w, b)          # pad/cast weights ONCE (static)
    out = my_module_forward(x, params)     # f32 matmul path at this tiny shape
    out = jax.block_until_ready(out)

    # Reference in plain JAX (exact softmax / erf GELU, matching PyTorch).
    h_ref = x @ w + b + 1.0
    p_ref = jax.nn.softmax(h_ref, axis=-1)
    o_ref = 0.5 * p_ref * (1.0 + lax.erf(p_ref / jnp.sqrt(2.0)))

    # approx=True reciprocal -> ~2^-12 relative error on the softmax; 1e-3 tol.
    assert out.shape == (B, Dout), "shape mismatch"
    assert jnp.allclose(out, o_ref, atol=1e-3, rtol=1e-3), "mismatch vs reference"

    print("KERNEL_OK")
</pallas_src>

<mosaic_0001>
module attributes {stable_mosaic.version = 11 : i64} {
  func.func @_kernel_single_k(%arg0: i32, %arg1: memref<8x128xf32, #tpu.memory_space<vmem>>, %arg2: memref<128x128xf32, #tpu.memory_space<vmem>>, %arg3: memref<1x128xf32, #tpu.memory_space<vmem>>, %arg4: memref<8x128xf32, #tpu.memory_space<vmem>>) attributes {dimension_semantics = [#tpu.dimension_semantics<parallel>], iteration_bounds = array<i64: 1>, scalar_prefetch = 0 : i64, scratch_operands = 0 : i64, tpu.core_type = #tpu.core_type<tc>, window_params = [{transform_indices = @transform_0, window_bounds = array<i64: 8, 128>}, {pipeline_mode = #tpu.pipeline_mode<synchronous>, transform_indices = @transform_1, window_bounds = array<i64: 128, 128>}, {pipeline_mode = #tpu.pipeline_mode<synchronous>, transform_indices = @transform_2, window_bounds = array<i64: 1, 128>}, {transform_indices = @transform_3, window_bounds = array<i64: 8, 128>}]} {
    %c0 = arith.constant 0 : index
    %c0_0 = arith.constant 0 : index
    %0 = vector.load %arg1[%c0, %c0_0] : memref<8x128xf32, #tpu.memory_space<vmem>>, vector<8x128xf32>
    %c0_1 = arith.constant 0 : index
    %c0_2 = arith.constant 0 : index
    %1 = vector.load %arg2[%c0_1, %c0_2] : memref<128x128xf32, #tpu.memory_space<vmem>>, vector<128x128xf32>
    %cst = arith.constant dense<0.000000e+00> : vector<8x128xf32>
    %2 = tpu.matmul %0, %1, %cst {dimension_numbers = #tpu.dot_dimension_numbers<[1], [0], [0], [1], [0, 0, 1, 1], [], []>} : vector<8x128xf32>, vector<128x128xf32>, vector<8x128xf32> -> vector<8x128xf32>
    %c0_3 = arith.constant 0 : index
    %c0_4 = arith.constant 0 : index
    %3 = vector.load %arg3[%c0_3, %c0_4] : memref<1x128xf32, #tpu.memory_space<vmem>>, vector<1x128xf32>
    %4 = vector.broadcast %3 : vector<1x128xf32> to vector<8x128xf32>
    %5 = arith.addf %2, %4 : vector<8x128xf32>
    %cst_5 = arith.constant dense<0xFF800000> : vector<8xf32>
    %6 = vector.multi_reduction <maximumf>, %5, %cst_5 [1] : vector<8x128xf32> to vector<8xf32>
    %7 = vector.shape_cast %6 : vector<8xf32> to vector<8x1xf32>
    %8 = vector.broadcast %7 : vector<8x1xf32> to vector<8x128xf32>
    %9 = arith.subf %5, %8 : vector<8x128xf32>
    %10 = math.exp %9 : vector<8x128xf32>
    %cst_6 = arith.constant dense<0.000000e+00> : vector<8xf32>
    %11 = vector.multi_reduction <add>, %10, %cst_6 [1] : vector<8x128xf32> to vector<8xf32>
    %12 = vector.shape_cast %11 : vector<8xf32> to vector<8x1xf32>
    %13 = tpu.reciprocal %12 {approx = true} : vector<8x1xf32> -> vector<8x1xf32>
    %14 = vector.broadcast %13 : vector<8x1xf32> to vector<8x128xf32>
    %15 = arith.mulf %10, %14 : vector<8x128xf32>
    %cst_7 = arith.constant 5.000000e-01 : f32
    %16 = vector.broadcast %cst_7 : f32 to vector<8x128xf32>
    %17 = arith.mulf %16, %15 : vector<8x128xf32>
    %cst_8 = arith.constant 0.707106769 : f32
    %18 = vector.broadcast %cst_8 : f32 to vector<8x128xf32>
    %19 = arith.mulf %15, %18 : vector<8x128xf32>
    %20 = math.erf %19 : vector<8x128xf32>
    %cst_9 = arith.constant 1.000000e+00 : f32
    %21 = vector.broadcast %cst_9 : f32 to vector<8x128xf32>
    %22 = arith.addf %21, %20 : vector<8x128xf32>
    %23 = arith.mulf %17, %22 : vector<8x128xf32>
    %c0_10 = arith.constant 0 : index
    %c0_11 = arith.constant 0 : index
    %24 = vector.load %arg4[%c0_10, %c0_11] : memref<8x128xf32, #tpu.memory_space<vmem>>, vector<8x128xf32>
    tpu.vector_store %arg4[%c0_10, %c0_11], %23 {strides = array<i32>} : memref<8x128xf32, #tpu.memory_space<vmem>>, vector<8x128xf32>,
    return
  }
  func.func @transform_0(%arg0: i32) -> (i32, i32) {
    %c0_i32 = arith.constant 0 : i32
    %c0_i32_0 = arith.constant 0 : i32
    return %arg0, %c0_i32 : i32, i32
  }
  func.func @transform_1(%arg0: i32) -> (i32, i32) {
    %c0_i32 = arith.constant 0 : i32
    %c0_i32_0 = arith.constant 0 : i32
    %c0_i32_1 = arith.constant 0 : i32
    return %c0_i32, %c0_i32_0 : i32, i32
  }
  func.func @transform_2(%arg0: i32) -> (i32, i32) {
    %c0_i32 = arith.constant 0 : i32
    %c0_i32_0 = arith.constant 0 : i32
    %c0_i32_1 = arith.constant 0 : i32
    return %c0_i32, %c0_i32_0 : i32, i32
  }
  func.func @transform_3(%arg0: i32) -> (i32, i32) {
    %c0_i32 = arith.constant 0 : i32
    %c0_i32_0 = arith.constant 0 : i32
    return %arg0, %c0_i32 : i32, i32
  }
}

module attributes {stable_mosaic.version = 11 : i64} {
  func.func @_kernel_single_k(%arg0: i32, %arg1: memref<8x128xf32, #tpu.memory_space<vmem>>, %arg2: memref<128x128xf32, #tpu.memory_space<vmem>>, %arg3: memref<1x128xf32, #tpu.memory_space<vmem>>, %arg4: memref<8x128xf32, #tpu.memory_space<vmem>>) attributes {dimension_semantics = [#tpu.dimension_semantics<parallel>], iteration_bounds = array<i64: 1>, scalar_prefetch = 0 : i64, scratch_operands = 0 : i64, tpu.core_type = #tpu.core_type<tc>, window_params = [{transform_indices = @transform_0, window_bounds = array<i64: 8, 128>}, {pipeline_mode = #tpu.pipeline_mode<synchronous>, transform_indices = @transform_1, window_bounds = array<i64: 128, 128>}, {pipeline_mode = #tpu.pipeline_mode<synchronous>, transform_indices = @transform_2, window_bounds = array<i64: 1, 128>}, {transform_indices = @transform_3, window_bounds = array<i64: 8, 128>}]} {
    %c0 = arith.constant 0 : index
    %c0_0 = arith.constant 0 : index
    %0 = vector.load %arg1[%c0, %c0_0] : memref<8x128xf32, #tpu.memory_space<vmem>>, vector<8x128xf32>
    %c0_1 = arith.constant 0 : index
    %c0_2 = arith.constant 0 : index
    %1 = vector.load %arg2[%c0_1, %c0_2] : memref<128x128xf32, #tpu.memory_space<vmem>>, vector<128x128xf32>
    %cst = arith.constant dense<0.000000e+00> : vector<8x128xf32>
    %2 = tpu.matmul %0, %1, %cst {dimension_numbers = #tpu.dot_dimension_numbers<[1], [0], [0], [1], [0, 0, 1, 1], [], []>} : vector<8x128xf32>, vector<128x128xf32>, vector<8x128xf32> -> vector<8x128xf32>
    %c0_3 = arith.constant 0 : index
    %c0_4 = arith.constant 0 : index
    %3 = vector.load %arg3[%c0_3, %c0_4] : memref<1x128xf32, #tpu.memory_space<vmem>>, vector<1x128xf32>
    %4 = vector.broadcast %3 : vector<1x128xf32> to vector<8x128xf32>
    %5 = arith.addf %2, %4 : vector<8x128xf32>
    %cst_5 = arith.constant dense<0xFF800000> : vector<8xf32>
    %6 = vector.multi_reduction <maximumf>, %5, %cst_5 [1] : vector<8x128xf32> to vector<8xf32>
    %7 = vector.shape_cast %6 : vector<8xf32> to vector<8x1xf32>
    %8 = vector.broadcast %7 : vector<8x1xf32> to vector<8x128xf32>
    %9 = arith.subf %5, %8 : vector<8x128xf32>
    %10 = math.exp %9 : vector<8x128xf32>
    %cst_6 = arith.constant dense<0.000000e+00> : vector<8xf32>
    %11 = vector.multi_reduction <add>, %10, %cst_6 [1] : vector<8x128xf32> to vector<8xf32>
    %12 = vector.shape_cast %11 : vector<8xf32> to vector<8x1xf32>
    %13 = tpu.reciprocal %12 {approx = true} : vector<8x1xf32> -> vector<8x1xf32>
    %14 = vector.broadcast %13 : vector<8x1xf32> to vector<8x128xf32>
    %15 = arith.mulf %10, %14 : vector<8x128xf32>
    %cst_7 = arith.constant 5.000000e-01 : f32
    %16 = vector.broadcast %cst_7 : f32 to vector<8x128xf32>
    %17 = arith.mulf %16, %15 : vector<8x128xf32>
    %cst_8 = arith.constant 0.707106769 : f32
    %18 = vector.broadcast %cst_8 : f32 to vector<8x128xf32>
    %19 = arith.mulf %15, %18 : vector<8x128xf32>
    %20 = math.erf %19 : vector<8x128xf32>
    %cst_9 = arith.constant 1.000000e+00 : f32
    %21 = vector.broadcast %cst_9 : f32 to vector<8x128xf32>
    %22 = arith.addf %21, %20 : vector<8x128xf32>
    %23 = arith.mulf %17, %22 : vector<8x128xf32>
    %c0_10 = arith.constant 0 : index
    %c0_11 = arith.constant 0 : index
    %24 = vector.load %arg4[%c0_10, %c0_11] : memref<8x128xf32, #tpu.memory_space<vmem>>, vector<8x128xf32>
    tpu.vector_store %arg4[%c0_10, %c0_11], %23 {strides = array<i32>} : memref<8x128xf32, #tpu.memory_space<vmem>>, vector<8x128xf32>,
    return
  }
  func.func @transform_0(%arg0: i32) -> (i32, i32) {
    %c0_i32 = arith.constant 0 : i32
    %c0_i32_0 = arith.constant 0 : i32
    return %arg0, %c0_i32 : i32, i32
  }
  func.func @transform_1(%arg0: i32) -> (i32, i32) {
    %c0_i32 = arith.constant 0 : i32
    %c0_i32_0 = arith.constant 0 : i32
    %c0_i32_1 = arith.constant 0 : i32
    return %c0_i32, %c0_i32_0 : i32, i32
  }
  func.func @transform_2(%arg0: i32) -> (i32, i32) {
    %c0_i32 = arith.constant 0 : i32
    %c0_i32_0 = arith.constant 0 : i32
    %c0_i32_1 = arith.constant 0 : i32
    return %c0_i32, %c0_i32_0 : i32, i32
  }
  func.func @transform_3(%arg0: i32) -> (i32, i32) {
    %c0_i32 = arith.constant 0 : i32
    %c0_i32_0 = arith.constant 0 : i32
    return %arg0, %c0_i32 : i32, i32
  }
}

</mosaic_0001>

<llo_original>
// kernel: tpu_custom_call.1
$region0: #{tpu_custom_call.1}
  #allocation0 [shape = 'u32[]', space=smem, size = 0x4, offset = 0x4, fixed_abs, tag = 'smem constant byte address 0x4 - core index']
  #allocation1 [shape = 'u32[144,128]{1,0:T(1,128)}', space=vmem, size = 0x12000, scoped, tag = 'internal scratch']
  %s0 = inlined_call_operand.hbm [shape: f32[8,128], index: 0, kind: input, shape index: {}]
  %s1 = inlined_call_operand.hbm [shape: f32[128,128], index: 1, kind: input, shape index: {}]
  %s2 = inlined_call_operand.vmem [shape: f32[1,128], index: 2, kind: input, shape index: {}]
  %s3 = inlined_call_operand.hbm [shape: f32[8,128], index: 3, kind: output, shape index: {}]
  %s4 = sld [smem:[#allocation0]]
  $region30: #{tpu_custom_call.1} parent=0
    _
  %s6 = ssub.s32 1, %s4
  %s7 = scalar_select 0, %s6, %s4
  $region1: #{tpu_custom_call.1} parent=0
    #allocation2 [shape = 'u8[4096]{0}', space=vmem, size = 0x1000, scoped, tag = 'input window, operand 0, single buffered']
    #allocation3 [shape = 's32[1]{0}', space=sflag, size = 0x4, scoped, tag = 'scoped memory for tpu_custom_call.1']
    #allocation4 [shape = 's32[1]{0}', space=sflag, size = 0x4, scoped, tag = 'scoped memory for tpu_custom_call.1']
    #allocation5 [shape = 'u8[65536]{0}', space=vmem, size = 0x10000, scoped, tag = 'input window, operand 1, single buffered']
    #allocation6 [shape = 's32[1]{0}', space=sflag, size = 0x4, scoped, tag = 'scoped memory for tpu_custom_call.1']
    #allocation7 [shape = 'u8[4096]{0}', space=vmem, size = 0x1000, scoped, tag = 'output window, operand 0, single buffered']
    %8 = vsyncpa [#allocation3], 0
    %9 = vsyncpa [#allocation6], 0
    %10 = vsyncpa [#allocation4], 0
    // Predicated region
    $region2: #{tpu_custom_call.1} parent=1 // pred_check
      _
    $region3: #{tpu_custom_call.1} parent=1 // pred_check_branch
      %12 = sbr.rel (0) target = $region5
    $region4: #{tpu_custom_call.1} parent=1 // pred_region
      %s14 = ssub.s32 128, 128
      %15 = vsyncadd [#allocation3], %s14
      %s17 = sshll.u32 [#allocation2], 4
      %s18 = int_to_ptr.vmem [resolvable:$true] %s17
      %20 = dma.hbm_to_vmem [thread:$0]  %s0, 128, %s18, [#allocation3]
    $region5: #{tpu_custom_call.1} parent=1 // pred_fallthru
      _
    // Predicated region
    $region6: #{tpu_custom_call.1} parent=1 // pred_check
      _
    $region7: #{tpu_custom_call.1} parent=1 // pred_check_branch
      %22 = sbr.rel (0) target = $region9
    $region8: #{tpu_custom_call.1} parent=1 // pred_region
      %s24 = ssub.s32 2048, 2048
      %25 = vsyncadd [#allocation6], %s24
      %s26 = sshll.u32 [#allocation5], 4
      %s27 = int_to_ptr.vmem [resolvable:$true] %s26
      %32 = dma.hbm_to_vmem [thread:$0]  %s1, 2048, %s27, [#allocation6], 128, 128, 8
    $region9: #{tpu_custom_call.1} parent=1 // pred_fallthru
      _
    // Predicated region
    $region10: #{tpu_custom_call.1} parent=1 // pred_check
      _
    $region11: #{tpu_custom_call.1} parent=1 // pred_check_branch
      %34 = sbr.rel (0) target = $region13
    $region12: #{tpu_custom_call.1} parent=1 // pred_region
      _
    $region13: #{tpu_custom_call.1} parent=1 // pred_fallthru
      _
    // Predicated region
    $region14: #{tpu_custom_call.1} parent=1 // pred_check
      _
    $region15: #{tpu_custom_call.1} parent=1 // pred_check_branch
      %36 = sbr.rel (0) target = $region17
    $region16: #{tpu_custom_call.1} parent=1 // pred_region
      %37 = dma.done [#allocation3], 128
    $region17: #{tpu_custom_call.1} parent=1 // pred_fallthru
      _
    // Predicated region
    $region18: #{tpu_custom_call.1} parent=1 // pred_check
      _
    $region19: #{tpu_custom_call.1} parent=1 // pred_check_branch
      %39 = sbr.rel (0) target = $region21
    $region20: #{tpu_custom_call.1} parent=1 // pred_region
      %40 = dma.done [#allocation6], 2048
    $region21: #{tpu_custom_call.1} parent=1 // pred_fallthru
      _
    %v41 = vld [vmem:[#allocation2] sm:$0xff]
    %v42 = vld [vmem:[#allocation5] sm:$0xff]
    %v43 = vld [vmem:[#allocation5 + $0x8] sm:$0xff]
    %v44 = vld [vmem:[#allocation5 + $0x10] sm:$0xff]
    %v45 = vld [vmem:[#allocation5 + $0x18] sm:$0xff]
    %v46 = vld [vmem:[#allocation5 + $0x20] sm:$0xff]
    %v47 = vld [vmem:[#allocation5 + $0x28] sm:$0xff]
    %v48 = vld [vmem:[#allocation5 + $0x30] sm:$0xff]
    %v49 = vld [vmem:[#allocation5 + $0x38] sm:$0xff]
    %v50 = vld [vmem:[#allocation5 + $0x40] sm:$0xff]
    %v51 = vld [vmem:[#allocation5 + $0x48] sm:$0xff]
    %v52 = vld [vmem:[#allocation5 + $0x50] sm:$0xff]
    %v53 = vld [vmem:[#allocation5 + $0x58] sm:$0xff]
    %v54 = vld [vmem:[#allocation5 + $0x60] sm:$0xff]
    %v55 = vld [vmem:[#allocation5 + $0x68] sm:$0xff]
    %v56 = vld [vmem:[#allocation5 + $0x70] sm:$0xff]
    %v57 = vld [vmem:[#allocation5 + $0x78] sm:$0xff]
    %v58 = vld [vmem:[%s2] sm:$0x1]
    %v60 = vlaneseq
    %v61 = vshrl.u32 %v60, 7
    %v62 = vsub.s32 0, %v61
    %v63 = vrot.slane %v58, %v62
    %65 = vmatprep.subr.mxu0 0.0
    %66 = vmatpush1.msra.mxu0 %v42
    %67 = vmatprep.subr.mxu0 0.0
    %68 = vmatpush1.msra.mxu0 %v43
    %69 = vmatprep.subr.mxu0 0.0
    %70 = vmatpush1.msra.mxu0 %v44
    %71 = vmatprep.subr.mxu0 0.0
    %72 = vmatpush1.msra.mxu0 %v45
    %73 = vmatprep.subr.mxu0 0.0
    %74 = vmatpush1.msra.mxu0 %v46
    %75 = vmatprep.subr.mxu0 0.0
    %76 = vmatpush1.msra.mxu0 %v47
    %77 = vmatprep.subr.mxu0 0.0
    %78 = vmatpush1.msra.mxu0 %v48
    %79 = vmatprep.subr.mxu0 0.0
    %80 = vmatpush1.msra.mxu0 %v49
    %81 = vmatprep.subr.mxu0 0.0
    %82 = vmatpush1.msra.mxu0 %v50
    %83 = vmatprep.subr.mxu0 0.0
    %84 = vmatpush1.msra.mxu0 %v51
    %85 = vmatprep.subr.mxu0 0.0
    %86 = vmatpush1.msra.mxu0 %v52
    %87 = vmatprep.subr.mxu0 0.0
    %88 = vmatpush1.msra.mxu0 %v53
    %89 = vmatprep.subr.mxu0 0.0
    %90 = vmatpush1.msra.mxu0 %v54
    %91 = vmatprep.subr.mxu0 0.0
    %92 = vmatpush1.msra.mxu0 %v55
    %93 = vmatprep.subr.mxu0 0.0
    %94 = vmatpush1.msra.mxu0 %v56
    %95 = vmatprep.subr.mxu0 0.0
    %96 = vmatpush1.msra.mxu0 %v57
    %97 = vmatprep.subr.mxu0 0.0
    %98 = vmatpush1.msra.mxu0 0.0
    %99 = vmatprep.subr.mxu0 0.0
    %100 = vmatpush1.msra.mxu0 0.0
    %101 = vmatprep.subr.mxu0 0.0
    %102 = vmatpush1.msra.mxu0 0.0
    %103 = vmatprep.subr.mxu0 0.0
    %104 = vmatpush1.msra.mxu0 0.0
    %105 = vmatprep.subr.mxu0 0.0
    %106 = vmatpush1.msra.mxu0 0.0
    %107 = vmatprep.subr.mxu0 0.0
    %108 = vmatpush1.msra.mxu0 0.0
    %109 = vmatprep.subr.mxu0 0.0
    %110 = vmatpush1.msra.mxu0 0.0
    %111 = vmatprep.subr.mxu0 0.0
    %112 = vmatpush1.msra.mxu0 0.0
    %113 = vmatprep.subr.mxu0 0.0
    %114 = vmatpush1.msra.mxu0 0.0
    %115 = vmatprep.subr.mxu0 0.0
    %116 = vmatpush1.msra.mxu0 0.0
    %117 = vmatprep.subr.mxu0 0.0
    %118 = vmatpush1.msra.mxu0 0.0
    %119 = vmatprep.subr.mxu0 0.0
    %120 = vmatpush1.msra.mxu0 0.0
    %121 = vmatprep.subr.mxu0 0.0
    %122 = vmatpush1.msra.mxu0 0.0
    %123 = vmatprep.subr.mxu0 0.0
    %124 = vmatpush1.msra.mxu0 0.0
    %125 = vmatprep.subr.mxu0 0.0
    %126 = vmatpush1.msra.mxu0 0.0
    %127 = vmatprep.subr.mxu0 0.0
    %128 = vmatpush1.msra.mxu0 0.0
    %129 = vmatprep.mubr.f32.mxu0 0.0
    %130 = vmatmul.mubr.f32.gmra.mrb[0].mxu0 %v41
    %v131 = vpop.f32.mrb[0].mxu0
    %v132 = vadd.f32 %v63, %v131
    %v133 = vpop.f32.mrb[0].mxu0
    %134 = vdwg.mxu0
    %135 = vmax.xlane.f32.xlu0 %v132
    %v136 = vpop.xlane.xlu0 %135
    %v137 = vsub.f32 %v132, %v136
    %v138 = vmul.f32 %v137, 1.442695
    %v139 = vpow.pop %v138
    %140 = vadd.xlane.f32.xlu0 %v139
    %v141 = vpop.xlane.xlu0 %140
    %v142 = vrcp.pop %v141
    %v143 = vmul.f32 %v139, %v142
    %v144 = vmul.f32 %v143, 0.5
    %v145 = vmul.f32 %v143, 0.70710677
    %v146 = verf.f32.pop %v145
    %v147 = vadd.f32 %v146, 1.0
    %v148 = vmul.f32 %v144, %v147
    %149 = vst [vmem:[#allocation7] sm:$0xff] %v148
    // Predicated region
    $region22: #{tpu_custom_call.1} parent=1 // pred_check
      _
    $region23: #{tpu_custom_call.1} parent=1 // pred_check_branch
      %151 = sbr.rel (0) target = $region25
    $region24: #{tpu_custom_call.1} parent=1 // pred_region
      %s153 = ssub.s32 128, 128
      %154 = vsyncadd [#allocation4], %s153
      %s156 = sshll.u32 [#allocation7], 4
      %s157 = int_to_ptr.vmem [resolvable:$true] %s156
      %159 = dma.vmem_to_hbm [thread:$0]  %s157, 128, %s3, [#allocation4]
    $region25: #{tpu_custom_call.1} parent=1 // pred_fallthru
      _
    // Predicated region
    $region26: #{tpu_custom_call.1} parent=1 // pred_check
      _
    $region27: #{tpu_custom_call.1} parent=1 // pred_check_branch
      %161 = sbr.rel (0) target = $region29
    $region28: #{tpu_custom_call.1} parent=1 // pred_region
      %162 = dma.done [#allocation4], 128
    $region29: #{tpu_custom_call.1} parent=1 // pred_fallthru
      _
    %163 = vsyncpa [#allocation3], 1
    %164 = vsyncpa [#allocation6], 1
    %165 = vsyncpa [#allocation4], 1

// kernel: tpu_custom_call.1
$region0: #{tpu_custom_call.1}
  #allocation0 [shape = 'u32[]', space=smem, size = 0x4, offset = 0x4, fixed_abs, tag = 'smem constant byte address 0x4 - core index']
  #allocation1 [shape = 'u32[144,128]{1,0:T(1,128)}', space=vmem, size = 0x12000, scoped, tag = 'internal scratch']
  %s0 = inlined_call_operand.hbm [shape: f32[8,128], index: 0, kind: input, shape index: {}]
  %s1 = inlined_call_operand.hbm [shape: f32[128,128], index: 1, kind: input, shape index: {}]
  %s2 = inlined_call_operand.vmem [shape: f32[1,128], index: 2, kind: input, shape index: {}]
  %s3 = inlined_call_operand.hbm [shape: f32[8,128], index: 3, kind: output, shape index: {}]
  %s4 = sld [smem:[#allocation0]]
  $region30: #{tpu_custom_call.1} parent=0
    _
  %s6 = ssub.s32 1, %s4
  %s7 = scalar_select 0, %s6, %s4
  $region1: #{tpu_custom_call.1} parent=0
    #allocation2 [shape = 'u8[4096]{0}', space=vmem, size = 0x1000, scoped, tag = 'input window, operand 0, single buffered']
    #allocation3 [shape = 's32[1]{0}', space=sflag, size = 0x4, scoped, tag = 'scoped memory for tpu_custom_call.1']
    #allocation4 [shape = 's32[1]{0}', space=sflag, size = 0x4, scoped, tag = 'scoped memory for tpu_custom_call.1']
    #allocation5 [shape = 'u8[65536]{0}', space=vmem, size = 0x10000, scoped, tag = 'input window, operand 1, single buffered']
    #allocation6 [shape = 's32[1]{0}', space=sflag, size = 0x4, scoped, tag = 'scoped memory for tpu_custom_call.1']
    #allocation7 [shape = 'u8[4096]{0}', space=vmem, size = 0x1000, scoped, tag = 'output window, operand 0, single buffered']
    %8 = vsyncpa [#allocation3], 0
    %9 = vsyncpa [#allocation6], 0
    %10 = vsyncpa [#allocation4], 0
    // Predicated region
    $region2: #{tpu_custom_call.1} parent=1 // pred_check
      _
    $region3: #{tpu_custom_call.1} parent=1 // pred_check_branch
      %12 = sbr.rel (0) target = $region5
    $region4: #{tpu_custom_call.1} parent=1 // pred_region
      %s14 = ssub.s32 128, 128
      %15 = vsyncadd [#allocation3], %s14
      %s17 = sshll.u32 [#allocation2], 4
      %s18 = int_to_ptr.vmem [resolvable:$true] %s17
      %20 = dma.hbm_to_vmem [thread:$0]  %s0, 128, %s18, [#allocation3]
    $region5: #{tpu_custom_call.1} parent=1 // pred_fallthru
      _
    // Predicated region
    $region6: #{tpu_custom_call.1} parent=1 // pred_check
      _
    $region7: #{tpu_custom_call.1} parent=1 // pred_check_branch
      %22 = sbr.rel (0) target = $region9
    $region8: #{tpu_custom_call.1} parent=1 // pred_region
      %s24 = ssub.s32 2048, 2048
      %25 = vsyncadd [#allocation6], %s24
      %s26 = sshll.u32 [#allocation5], 4
      %s27 = int_to_ptr.vmem [resolvable:$true] %s26
      %32 = dma.hbm_to_vmem [thread:$0]  %s1, 2048, %s27, [#allocation6], 128, 128, 8
    $region9: #{tpu_custom_call.1} parent=1 // pred_fallthru
      _
    // Predicated region
    $region10: #{tpu_custom_call.1} parent=1 // pred_check
      _
    $region11: #{tpu_custom_call.1} parent=1 // pred_check_branch
      %34 = sbr.rel (0) target = $region13
    $region12: #{tpu_custom_call.1} parent=1 // pred_region
      _
    $region13: #{tpu_custom_call.1} parent=1 // pred_fallthru
      _
    // Predicated region
    $region14: #{tpu_custom_call.1} parent=1 // pred_check
      _
    $region15: #{tpu_custom_call.1} parent=1 // pred_check_branch
      %36 = sbr.rel (0) target = $region17
    $region16: #{tpu_custom_call.1} parent=1 // pred_region
      %37 = dma.done [#allocation3], 128
    $region17: #{tpu_custom_call.1} parent=1 // pred_fallthru
      _
    // Predicated region
    $region18: #{tpu_custom_call.1} parent=1 // pred_check
      _
    $region19: #{tpu_custom_call.1} parent=1 // pred_check_branch
      %39 = sbr.rel (0) target = $region21
    $region20: #{tpu_custom_call.1} parent=1 // pred_region
      %40 = dma.done [#allocation6], 2048
    $region21: #{tpu_custom_call.1} parent=1 // pred_fallthru
      _
    %v41 = vld [vmem:[#allocation2] sm:$0xff]
    %v42 = vld [vmem:[#allocation5] sm:$0xff]
    %v43 = vld [vmem:[#allocation5 + $0x8] sm:$0xff]
    %v44 = vld [vmem:[#allocation5 + $0x10] sm:$0xff]
    %v45 = vld [vmem:[#allocation5 + $0x18] sm:$0xff]
    %v46 = vld [vmem:[#allocation5 + $0x20] sm:$0xff]
    %v47 = vld [vmem:[#allocation5 + $0x28] sm:$0xff]
    %v48 = vld [vmem:[#allocation5 + $0x30] sm:$0xff]
    %v49 = vld [vmem:[#allocation5 + $0x38] sm:$0xff]
    %v50 = vld [vmem:[#allocation5 + $0x40] sm:$0xff]
    %v51 = vld [vmem:[#allocation5 + $0x48] sm:$0xff]
    %v52 = vld [vmem:[#allocation5 + $0x50] sm:$0xff]
    %v53 = vld [vmem:[#allocation5 + $0x58] sm:$0xff]
    %v54 = vld [vmem:[#allocation5 + $0x60] sm:$0xff]
    %v55 = vld [vmem:[#allocation5 + $0x68] sm:$0xff]
    %v56 = vld [vmem:[#allocation5 + $0x70] sm:$0xff]
    %v57 = vld [vmem:[#allocation5 + $0x78] sm:$0xff]
    %v58 = vld [vmem:[%s2] sm:$0x1]
    %v60 = vlaneseq
    %v61 = vshrl.u32 %v60, 7
    %v62 = vsub.s32 0, %v61
    %v63 = vrot.slane %v58, %v62
    %65 = vmatprep.subr.mxu0 0.0
    %66 = vmatpush1.msra.mxu0 %v42
    %67 = vmatprep.subr.mxu0 0.0
    %68 = vmatpush1.msra.mxu0 %v43
    %69 = vmatprep.subr.mxu0 0.0
    %70 = vmatpush1.msra.mxu0 %v44
    %71 = vmatprep.subr.mxu0 0.0
    %72 = vmatpush1.msra.mxu0 %v45
    %73 = vmatprep.subr.mxu0 0.0
    %74 = vmatpush1.msra.mxu0 %v46
    %75 = vmatprep.subr.mxu0 0.0
    %76 = vmatpush1.msra.mxu0 %v47
    %77 = vmatprep.subr.mxu0 0.0
    %78 = vmatpush1.msra.mxu0 %v48
    %79 = vmatprep.subr.mxu0 0.0
    %80 = vmatpush1.msra.mxu0 %v49
    %81 = vmatprep.subr.mxu0 0.0
    %82 = vmatpush1.msra.mxu0 %v50
    %83 = vmatprep.subr.mxu0 0.0
    %84 = vmatpush1.msra.mxu0 %v51
    %85 = vmatprep.subr.mxu0 0.0
    %86 = vmatpush1.msra.mxu0 %v52
    %87 = vmatprep.subr.mxu0 0.0
    %88 = vmatpush1.msra.mxu0 %v53
    %89 = vmatprep.subr.mxu0 0.0
    %90 = vmatpush1.msra.mxu0 %v54
    %91 = vmatprep.subr.mxu0 0.0
    %92 = vmatpush1.msra.mxu0 %v55
    %93 = vmatprep.subr.mxu0 0.0
    %94 = vmatpush1.msra.mxu0 %v56
    %95 = vmatprep.subr.mxu0 0.0
    %96 = vmatpush1.msra.mxu0 %v57
    %97 = vmatprep.subr.mxu0 0.0
    %98 = vmatpush1.msra.mxu0 0.0
    %99 = vmatprep.subr.mxu0 0.0
    %100 = vmatpush1.msra.mxu0 0.0
    %101 = vmatprep.subr.mxu0 0.0
    %102 = vmatpush1.msra.mxu0 0.0
    %103 = vmatprep.subr.mxu0 0.0
    %104 = vmatpush1.msra.mxu0 0.0
    %105 = vmatprep.subr.mxu0 0.0
    %106 = vmatpush1.msra.mxu0 0.0
    %107 = vmatprep.subr.mxu0 0.0
    %108 = vmatpush1.msra.mxu0 0.0
    %109 = vmatprep.subr.mxu0 0.0
    %110 = vmatpush1.msra.mxu0 0.0
    %111 = vmatprep.subr.mxu0 0.0
    %112 = vmatpush1.msra.mxu0 0.0
    %113 = vmatprep.subr.mxu0 0.0
    %114 = vmatpush1.msra.mxu0 0.0
    %115 = vmatprep.subr.mxu0 0.0
    %116 = vmatpush1.msra.mxu0 0.0
    %117 = vmatprep.subr.mxu0 0.0
    %118 = vmatpush1.msra.mxu0 0.0
    %119 = vmatprep.subr.mxu0 0.0
    %120 = vmatpush1.msra.mxu0 0.0
    %121 = vmatprep.subr.mxu0 0.0
    %122 = vmatpush1.msra.mxu0 0.0
    %123 = vmatprep.subr.mxu0 0.0
    %124 = vmatpush1.msra.mxu0 0.0
    %125 = vmatprep.subr.mxu0 0.0
    %126 = vmatpush1.msra.mxu0 0.0
    %127 = vmatprep.subr.mxu0 0.0
    %128 = vmatpush1.msra.mxu0 0.0
    %129 = vmatprep.mubr.f32.mxu0 0.0
    %130 = vmatmul.mubr.f32.gmra.mrb[0].mxu0 %v41
    %v131 = vpop.f32.mrb[0].mxu0
    %v132 = vadd.f32 %v63, %v131
    %v133 = vpop.f32.mrb[0].mxu0
    %134 = vdwg.mxu0
    %135 = vmax.xlane.f32.xlu0 %v132
    %v136 = vpop.xlane.xlu0 %135
    %v137 = vsub.f32 %v132, %v136
    %v138 = vmul.f32 %v137, 1.442695
    %v139 = vpow.pop %v138
    %140 = vadd.xlane.f32.xlu0 %v139
    %v141 = vpop.xlane.xlu0 %140
    %v142 = vrcp.pop %v141
    %v143 = vmul.f32 %v139, %v142
    %v144 = vmul.f32 %v143, 0.5
    %v145 = vmul.f32 %v143, 0.70710677
    %v146 = verf.f32.pop %v145
    %v147 = vadd.f32 %v146, 1.0
    %v148 = vmul.f32 %v144, %v147
    %149 = vst [vmem:[#allocation7] sm:$0xff] %v148
    // Predicated region
    $region22: #{tpu_custom_call.1} parent=1 // pred_check
      _
    $region23: #{tpu_custom_call.1} parent=1 // pred_check_branch
      %151 = sbr.rel (0) target = $region25
    $region24: #{tpu_custom_call.1} parent=1 // pred_region
      %s153 = ssub.s32 128, 128
      %154 = vsyncadd [#allocation4], %s153
      %s156 = sshll.u32 [#allocation7], 4
      %s157 = int_to_ptr.vmem [resolvable:$true] %s156
      %159 = dma.vmem_to_hbm [thread:$0]  %s157, 128, %s3, [#allocation4]
    $region25: #{tpu_custom_call.1} parent=1 // pred_fallthru
      _
    // Predicated region
    $region26: #{tpu_custom_call.1} parent=1 // pred_check
      _
    $region27: #{tpu_custom_call.1} parent=1 // pred_check_branch
      %161 = sbr.rel (0) target = $region29
    $region28: #{tpu_custom_call.1} parent=1 // pred_region
      %162 = dma.done [#allocation4], 128
    $region29: #{tpu_custom_call.1} parent=1 // pred_fallthru
      _
    %163 = vsyncpa [#allocation3], 1
    %164 = vsyncpa [#allocation6], 1
    %165 = vsyncpa [#allocation4], 1

</llo_original>
